<compile_context>
chip_gen: v6e
topology: v6e:2x2x1
jax: 0.10.0
libtpu: 0.0.40
codegen_flags: <defaults>
</compile_context>

<pallas_src>
import functools
import math

import numpy as np
import jax
import jax.numpy as jnp
from jax.experimental import pallas as pl
from jax.experimental.pallas import tpu as pltpu


_SQRT_2_OVER_PI = math.sqrt(2.0 / math.pi)


def _gelu_tanh(x):
    # GELU with tanh approximation (matches nn.GELU(approximate='tanh')).
    return 0.5 * x * (1.0 + jnp.tanh(_SQRT_2_OVER_PI * (x + 0.044715 * x * x * x)))


def _round_up(x, m):
    return ((x + m - 1) // m) * m


def _vmem_budget():
    """Returns (vmem_limit_bytes, tile_selection_budget_bytes) for this chip."""
    try:
        cap = int(pltpu.get_tpu_info().vmem_capacity_bytes)
    except Exception:
        cap = 64 * 1024 * 1024          # v7x per-TensorCore VMEM (most restrictive)
    cap = max(cap, 32 * 1024 * 1024)
    # Leave headroom below physical capacity for compiler-internal scratch.
    limit = min(cap - 8 * 1024 * 1024, 112 * 1024 * 1024)
    budget = int(limit * 0.8)           # tile-selection budget stays below the limit
    return limit, budget


# ----------------------------------------------------------------------------
# Fused MLP kernel: y = (gelu(x @ Wfc + bfc)) @ Wproj + bproj, hidden in VMEM.
# ----------------------------------------------------------------------------
def _mlp_fused_kernel(x_ref, wfc_ref, bfc_ref, wpr_ref, bpr_ref, o_ref):
    x = x_ref[...].astype(jnp.bfloat16)
    h = jnp.dot(x, wfc_ref[...], preferred_element_type=jnp.float32)
    h = _gelu_tanh(h + bfc_ref[...].astype(jnp.float32))
    h = h.astype(jnp.bfloat16)                    # bf16 MXU operand for 2nd matmul
    y = jnp.dot(h, wpr_ref[...], preferred_element_type=jnp.float32)
    y = y + bpr_ref[...].astype(jnp.float32)
    o_ref[...] = y.astype(o_ref.dtype)


def _fused_row_tile(m_pad, c, h, budget):
    """Row tile for the fused kernel, or None if it can't fit the VMEM budget."""
    # Double-buffered bf16 weights + f32 biases (constant across the grid).
    weights = 2 * (c * h + h * c) * 2 + 2 * (h + c) * 4
    cands = [t for t in (512, 256, 128, 64, 32, 16, 8) if t <= m_pad and m_pad % t == 0]
    if not cands:
        cands = [m_pad]
    for tm in cands:
        io = 2 * tm * c * 4 * 2                       # f32 x in + f32 y out, double-buffered
        inter = tm * h * 4 + tm * h * 2 + tm * c * 4  # f32 pre-act, bf16 hidden, f32 y
        if weights + io + (3 * inter) // 2 <= budget:
            # Keep >= 2 row blocks when possible so both v7x TensorCores get work.
            if m_pad // tm == 1 and tm >= 256:
                tm //= 2
            return tm
    return None


def _mlp_fused(x2d, w_fc, b_fc, w_proj, b_proj, *, tm, vmem_limit):
    m, c = x2d.shape
    h = w_fc.shape[1]
    cost = pl.CostEstimate(
        flops=4 * m * c * h,
        transcendentals=m * h,
        bytes_accessed=m * c * 4 * 2 + 2 * c * h * 2 + (h + c) * 4,
    )
    return pl.pallas_call(
        _mlp_fused_kernel,
        out_shape=jax.ShapeDtypeStruct((m, c), x2d.dtype),
        grid_spec=pltpu.PrefetchScalarGridSpec(
            num_scalar_prefetch=0,
            grid=(m // tm,),
            in_specs=[
                pl.BlockSpec((tm, c), lambda i: (i, 0)),
                pl.BlockSpec((c, h), lambda i: (0, 0)),
                pl.BlockSpec((1, h), lambda i: (0, 0)),
                pl.BlockSpec((h, c), lambda i: (0, 0)),
                pl.BlockSpec((1, c), lambda i: (0, 0)),
            ],
            out_specs=pl.BlockSpec((tm, c), lambda i: (i, 0)),
        ),
        compiler_params=pltpu.CompilerParams(
            dimension_semantics=("parallel",),
            vmem_limit_bytes=vmem_limit,
        ),
        cost_estimate=cost,
    )(x2d, w_fc, b_fc.reshape(1, h), w_proj, b_proj.reshape(1, c))


# ----------------------------------------------------------------------------
# Fallback: tiled linear (+ optional tanh-GELU) with K reduction axis.
# ----------------------------------------------------------------------------
def _linear_kernel(x_ref, w_ref, b_ref, o_ref, acc_ref, *, apply_gelu):
    # grid = (M//tm, N//tn, K//tk); K is the reduction ("arbitrary") axis.
    @pl.when(pl.program_id(2) == 0)
    def _():
        acc_ref[...] = jnp.zeros_like(acc_ref)

    acc_ref[...] += jnp.dot(
        x_ref[...].astype(jnp.bfloat16),            # bf16 MXU operands
        w_ref[...],
        preferred_element_type=jnp.float32)         # f32 accumulation

    @pl.when(pl.program_id(2) == pl.num_programs(2) - 1)
    def _():
        y = acc_ref[...] + b_ref[...].astype(jnp.float32)
        if apply_gelu:
            y = _gelu_tanh(y)
        o_ref[...] = y.astype(o_ref.dtype)


def _pick_row_tile(m_pad):
    for t in (512, 256, 128, 64, 32, 16, 8):
        if t <= m_pad and m_pad % t == 0:
            return t
    return m_pad


def _linear_tiles(m_pad, k, n, x_itemsize, o_itemsize, budget):
    tm = _pick_row_tile(m_pad)
    if m_pad // tm == 1 and tm >= 256:
        tm //= 2                                    # >= 2 parallel row blocks (v7x)
    # Prefer a full-K tile (no reduction grid axis), then a large lane-dense tn.
    tk_cands = [k] + [t for t in (2048, 1024, 512, 256, 128) if t < k and k % t == 0]
    tn_cands = sorted({n, *[t for t in (4096, 2048, 1024, 512, 256, 128)
                            if t < n and n % t == 0]}, reverse=True)
    for tk in tk_cands:
        for tn in tn_cands:
            need = (2 * tm * tk * x_itemsize        # x tiles (double-buffered)
                    + 2 * tk * tn * 2               # bf16 weight tiles
                    + 2 * tm * tn * o_itemsize      # output tiles
                    + tm * tn * 4                   # f32 accumulator scratch
                    + 2 * tn * 4)                   # bias
            if need <= budget:
                return tm, tn, tk
    return tm, tn_cands[-1], tk_cands[-1]


def _linear(x2d, w_kn, b, *, apply_gelu, out_dtype, budget, vmem_limit):
    m, k = x2d.shape
    k2, n = w_kn.shape
    assert k == k2 and b.shape == (n,)
    o_itemsize = np.dtype(out_dtype).itemsize
    tm, tn, tk = _linear_tiles(m, k, n, x2d.dtype.itemsize, o_itemsize, budget)
    grid = (m // tm, n // tn, k // tk)

    kernel = functools.partial(_linear_kernel, apply_gelu=apply_gelu)
    cost = pl.CostEstimate(
        flops=2 * m * n * k,
        transcendentals=m * n if apply_gelu else 0,
        bytes_accessed=(m * k * x2d.dtype.itemsize + k * n * 2
                        + m * n * o_itemsize + n * 4),
    )
    return pl.pallas_call(
        kernel,
        out_shape=jax.ShapeDtypeStruct((m, n), out_dtype),
        grid_spec=pltpu.PrefetchScalarGridSpec(
            num_scalar_prefetch=0,
            grid=grid,
            in_specs=[
                pl.BlockSpec((tm, tk), lambda i, j, kk: (i, kk)),
                pl.BlockSpec((tk, tn), lambda i, j, kk: (kk, j)),
                pl.BlockSpec((1, tn), lambda i, j, kk: (0, j)),
            ],
            out_specs=pl.BlockSpec((tm, tn), lambda i, j, kk: (i, j)),
            scratch_shapes=[pltpu.VMEM((tm, tn), jnp.float32)],
        ),
        compiler_params=pltpu.CompilerParams(
            dimension_semantics=("parallel", "parallel", "arbitrary"),
            vmem_limit_bytes=vmem_limit,
        ),
        cost_estimate=cost,
    )(x2d, w_kn, b.reshape(1, n))


# ----------------------------------------------------------------------------
# Full MLP forward:  x -> c_fc -> gelu(tanh) -> c_proj
# ----------------------------------------------------------------------------
def mlp_forward(x, params, *, force_unfused=False):
    """x: (B, T, C) -> (B, T, C)."""
    b_dim, t_dim, c = x.shape
    h = params["w_fc"].shape[1]
    m = b_dim * t_dim
    x2d = x.reshape(m, c)

    vmem_limit, budget = _vmem_budget()

    # Pad rows so a clean row tile always divides M (no full-dim mega-tile cliff).
    m_pad = _round_up(m, 512) if m >= 512 else _round_up(m, 8)
    if m_pad != m:
        x2d = jnp.pad(x2d, ((0, m_pad - m), (0, 0)))

    tm_fused = None if force_unfused else _fused_row_tile(m_pad, c, h, budget)
    if tm_fused is not None:
        # Fused path: hidden activation never leaves VMEM.
        y2d = _mlp_fused(x2d, params["w_fc"], params["b_fc"],
                         params["w_proj"], params["b_proj"],
                         tm=tm_fused, vmem_limit=vmem_limit)
    else:
        # Fallback: two matmul kernels; the hidden tensor round-trips HBM in bf16.
        hid = _linear(x2d, params["w_fc"], params["b_fc"], apply_gelu=True,
                      out_dtype=jnp.bfloat16, budget=budget, vmem_limit=vmem_limit)
        y2d = _linear(hid, params["w_proj"], params["b_proj"], apply_gelu=False,
                      out_dtype=x.dtype, budget=budget, vmem_limit=vmem_limit)

    return y2d[:m].reshape(b_dim, t_dim, c)


# ----------------------------------------------------------------------------
# Deterministic parameter init.  Weights are PRE-TRANSPOSED (in, out) = (K, N)
# and stored in bfloat16 (MXU operand dtype); biases stay f32.  Init
# statistics match nn.Linear (uniform +/- 1/sqrt(in_features)).
# NANOGPT_SCALE_INIT is a training-time init flag; it does not affect forward.
# ----------------------------------------------------------------------------
def init_params(key, n_embd, weight_dtype=jnp.bfloat16):
    hidden = 4 * n_embd
    k1, k2, k3, k4 = jax.random.split(key, 4)
    bound_fc = 1.0 / math.sqrt(n_embd)
    bound_proj = 1.0 / math.sqrt(hidden)
    return {
        "w_fc": jax.random.uniform(k1, (n_embd, hidden), jnp.float32,
                                   -bound_fc, bound_fc).astype(weight_dtype),
        "b_fc": jax.random.uniform(k2, (hidden,), jnp.float32,
                                   -bound_fc, bound_fc),
        "w_proj": jax.random.uniform(k3, (hidden, n_embd), jnp.float32,
                                     -bound_proj, bound_proj).astype(weight_dtype),
        "b_proj": jax.random.uniform(k4, (n_embd,), jnp.float32,
                                     -bound_proj, bound_proj),
    }


def _mlp_reference(x2d, params):
    """Pure-jnp reference with the same bf16 quantization points as the kernel."""
    xb = x2d.astype(jnp.bfloat16).astype(jnp.float32)
    w_fc = params["w_fc"].astype(jnp.float32)
    w_pr = params["w_proj"].astype(jnp.float32)
    h = xb @ w_fc + params["b_fc"]
    h = 0.5 * h * (1.0 + jnp.tanh(_SQRT_2_OVER_PI * (h + 0.044715 * h ** 3)))
    h = h.astype(jnp.bfloat16).astype(jnp.float32)
    return h @ w_pr + params["b_proj"]


if __name__ == "__main__":
    B, T, n_embd = 2, 8, 32

    key = jax.random.PRNGKey(0)
    kx, kp = jax.random.split(key)
    x = jax.random.normal(kx, (B, T, n_embd), jnp.float32)
    params = init_params(kp, n_embd)

    # Primary (fused) path.
    y = mlp_forward(x, params)
    jax.block_until_ready(y)
    assert y.shape == (B, T, n_embd) and y.dtype == jnp.float32

    y_ref = _mlp_reference(x.reshape(-1, n_embd), params).reshape(B, T, n_embd)
    assert jnp.allclose(y, y_ref, rtol=1e-2, atol=1e-2), \
        float(jnp.max(jnp.abs(y - y_ref)))

    # Also exercise the two-kernel fallback path (used when the fused tiles
    # would not fit the per-chip VMEM budget).
    y2 = mlp_forward(x, params, force_unfused=True)
    jax.block_until_ready(y2)
    assert jnp.allclose(y2, y_ref, rtol=1e-2, atol=1e-2), \
        float(jnp.max(jnp.abs(y2 - y_ref)))

    print("KERNEL_OK")
</pallas_src>

<mosaic_0001>
module attributes {stable_mosaic.version = 11 : i64} {
  func.func @_mlp_fused_kernel(%arg0: i32, %arg1: memref<16x32xf32, #tpu.memory_space<vmem>>, %arg2: memref<32x128xbf16, #tpu.memory_space<vmem>>, %arg3: memref<1x128xf32, #tpu.memory_space<vmem>>, %arg4: memref<128x32xbf16, #tpu.memory_space<vmem>>, %arg5: memref<1x32xf32, #tpu.memory_space<vmem>>, %arg6: memref<16x32xf32, #tpu.memory_space<vmem>>) attributes {dimension_semantics = [#tpu.dimension_semantics<parallel>], iteration_bounds = array<i64: 1>, scalar_prefetch = 0 : i64, scratch_operands = 0 : i64, tpu.core_type = #tpu.core_type<tc>, window_params = [{transform_indices = @transform_0, window_bounds = array<i64: 16, 32>}, {pipeline_mode = #tpu.pipeline_mode<synchronous>, transform_indices = @transform_1, window_bounds = array<i64: 32, 128>}, {pipeline_mode = #tpu.pipeline_mode<synchronous>, transform_indices = @transform_2, window_bounds = array<i64: 1, 128>}, {pipeline_mode = #tpu.pipeline_mode<synchronous>, transform_indices = @transform_3, window_bounds = array<i64: 128, 32>}, {pipeline_mode = #tpu.pipeline_mode<synchronous>, transform_indices = @transform_4, window_bounds = array<i64: 1, 32>}, {transform_indices = @transform_5, window_bounds = array<i64: 16, 32>}]} {
    %c0 = arith.constant 0 : index
    %c0_0 = arith.constant 0 : index
    %0 = vector.load %arg1[%c0, %c0_0] : memref<16x32xf32, #tpu.memory_space<vmem>>, vector<16x32xf32>
    %1 = arith.truncf %0 : vector<16x32xf32> to vector<16x32xbf16>
    %c0_1 = arith.constant 0 : index
    %c0_2 = arith.constant 0 : index
    %2 = vector.load %arg2[%c0_1, %c0_2] : memref<32x128xbf16, #tpu.memory_space<vmem>>, vector<32x128xbf16>
    %cst = arith.constant dense<0.000000e+00> : vector<16x128xf32>
    %3 = tpu.matmul %1, %2, %cst {dimension_numbers = #tpu.dot_dimension_numbers<[1], [0], [0], [1], [0, 0, 1, 1], [], []>} : vector<16x32xbf16>, vector<32x128xbf16>, vector<16x128xf32> -> vector<16x128xf32>
    %c0_3 = arith.constant 0 : index
    %c0_4 = arith.constant 0 : index
    %4 = vector.load %arg3[%c0_3, %c0_4] : memref<1x128xf32, #tpu.memory_space<vmem>>, vector<1x128xf32>
    %5 = vector.broadcast %4 : vector<1x128xf32> to vector<16x128xf32>
    %6 = arith.addf %3, %5 : vector<16x128xf32>
    %cst_5 = arith.constant 5.000000e-01 : f32
    %7 = vector.broadcast %cst_5 : f32 to vector<16x128xf32>
    %8 = arith.mulf %7, %6 : vector<16x128xf32>
    %cst_6 = arith.constant 4.471500e-02 : f32
    %9 = vector.broadcast %cst_6 : f32 to vector<16x128xf32>
    %10 = arith.mulf %9, %6 : vector<16x128xf32>
    %11 = arith.mulf %10, %6 : vector<16x128xf32>
    %12 = arith.mulf %11, %6 : vector<16x128xf32>
    %13 = arith.addf %6, %12 : vector<16x128xf32>
    %cst_7 = arith.constant 0.797884583 : f32
    %14 = vector.broadcast %cst_7 : f32 to vector<16x128xf32>
    %15 = arith.mulf %14, %13 : vector<16x128xf32>
    %16 = math.tanh %15 : vector<16x128xf32>
    %cst_8 = arith.constant 1.000000e+00 : f32
    %17 = vector.broadcast %cst_8 : f32 to vector<16x128xf32>
    %18 = arith.addf %17, %16 : vector<16x128xf32>
    %19 = arith.mulf %8, %18 : vector<16x128xf32>
    %20 = arith.truncf %19 : vector<16x128xf32> to vector<16x128xbf16>
    %c0_9 = arith.constant 0 : index
    %c0_10 = arith.constant 0 : index
    %21 = vector.load %arg4[%c0_9, %c0_10] : memref<128x32xbf16, #tpu.memory_space<vmem>>, vector<128x32xbf16>
    %cst_11 = arith.constant dense<0.000000e+00> : vector<16x32xf32>
    %22 = tpu.matmul %20, %21, %cst_11 {dimension_numbers = #tpu.dot_dimension_numbers<[1], [0], [0], [1], [0, 0, 1, 1], [], []>} : vector<16x128xbf16>, vector<128x32xbf16>, vector<16x32xf32> -> vector<16x32xf32>
    %c0_12 = arith.constant 0 : index
    %c0_13 = arith.constant 0 : index
    %23 = vector.load %arg5[%c0_12, %c0_13] : memref<1x32xf32, #tpu.memory_space<vmem>>, vector<1x32xf32>
    %24 = vector.broadcast %23 : vector<1x32xf32> to vector<16x32xf32>
    %25 = arith.addf %22, %24 : vector<16x32xf32>
    %c0_14 = arith.constant 0 : index
    %c0_15 = arith.constant 0 : index
    %26 = vector.load %arg6[%c0_14, %c0_15] : memref<16x32xf32, #tpu.memory_space<vmem>>, vector<16x32xf32>
    tpu.vector_store %arg6[%c0_14, %c0_15], %25 {strides = array<i32>} : memref<16x32xf32, #tpu.memory_space<vmem>>, vector<16x32xf32>,
    return
  }
  func.func @transform_0(%arg0: i32) -> (i32, i32) {
    %c0_i32 = arith.constant 0 : i32
    %c0_i32_0 = arith.constant 0 : i32
    return %arg0, %c0_i32 : i32, i32
  }
  func.func @transform_1(%arg0: i32) -> (i32, i32) {
    %c0_i32 = arith.constant 0 : i32
    %c0_i32_0 = arith.constant 0 : i32
    %c0_i32_1 = arith.constant 0 : i32
    return %c0_i32, %c0_i32_0 : i32, i32
  }
  func.func @transform_2(%arg0: i32) -> (i32, i32) {
    %c0_i32 = arith.constant 0 : i32
    %c0_i32_0 = arith.constant 0 : i32
    %c0_i32_1 = arith.constant 0 : i32
    return %c0_i32, %c0_i32_0 : i32, i32
  }
  func.func @transform_3(%arg0: i32) -> (i32, i32) {
    %c0_i32 = arith.constant 0 : i32
    %c0_i32_0 = arith.constant 0 : i32
    %c0_i32_1 = arith.constant 0 : i32
    return %c0_i32, %c0_i32_0 : i32, i32
  }
  func.func @transform_4(%arg0: i32) -> (i32, i32) {
    %c0_i32 = arith.constant 0 : i32
    %c0_i32_0 = arith.constant 0 : i32
    %c0_i32_1 = arith.constant 0 : i32
    return %c0_i32, %c0_i32_0 : i32, i32
  }
  func.func @transform_5(%arg0: i32) -> (i32, i32) {
    %c0_i32 = arith.constant 0 : i32
    %c0_i32_0 = arith.constant 0 : i32
    return %arg0, %c0_i32 : i32, i32
  }
}

</mosaic_0001>

<llo_original>
// kernel: tpu_custom_call.1
$region0: #{tpu_custom_call.1}
  #allocation0 [shape = 'u32[]', space=smem, size = 0x4, offset = 0x4, fixed_abs, tag = 'smem constant byte address 0x4 - core index']
  #allocation1 [shape = 'u32[144,128]{1,0:T(1,128)}', space=vmem, size = 0x12000, scoped, tag = 'internal scratch']
  %s0 = inlined_call_operand.vmem [shape: f32[16,32], index: 0, kind: input, shape index: {}]
  %s1 = inlined_call_operand.vmem [shape: bf16[32,128], index: 1, kind: input, shape index: {}]
  %s2 = inlined_call_operand.vmem [shape: f32[1,128], index: 2, kind: input, shape index: {}]
  %s3 = inlined_call_operand.vmem [shape: bf16[128,32], index: 3, kind: input, shape index: {}]
  %s4 = inlined_call_operand.vmem [shape: f32[1,32], index: 4, kind: input, shape index: {}]
  %s5 = inlined_call_operand.hbm [shape: f32[16,32], index: 5, kind: output, shape index: {}]
  %s6 = sld [smem:[#allocation0]]
  $region30: #{tpu_custom_call.1} parent=0
    _
  %s8 = ssub.s32 1, %s6
  %s9 = scalar_select 0, %s8, %s6
  $region1: #{tpu_custom_call.1} parent=0
    #allocation2 [shape = 'u8[8192]{0}', space=vmem, size = 0x2000, scoped, tag = 'output window, operand 0, single buffered']
    #allocation3 [shape = 's32[1]{0}', space=sflag, size = 0x4, scoped, tag = 'scoped memory for tpu_custom_call.1']
    %10 = vsyncpa [#allocation3], 0
    // Predicated region
    $region2: #{tpu_custom_call.1} parent=1 // pred_check
      _
    $region3: #{tpu_custom_call.1} parent=1 // pred_check_branch
      %12 = sbr.rel (0) target = $region5
    $region4: #{tpu_custom_call.1} parent=1 // pred_region
      _
    $region5: #{tpu_custom_call.1} parent=1 // pred_fallthru
      _
    // Predicated region
    $region6: #{tpu_custom_call.1} parent=1 // pred_check
      _
    $region7: #{tpu_custom_call.1} parent=1 // pred_check_branch
      %14 = sbr.rel (0) target = $region9
    $region8: #{tpu_custom_call.1} parent=1 // pred_region
      _
    $region9: #{tpu_custom_call.1} parent=1 // pred_fallthru
      _
    // Predicated region
    $region10: #{tpu_custom_call.1} parent=1 // pred_check
      _
    $region11: #{tpu_custom_call.1} parent=1 // pred_check_branch
      %16 = sbr.rel (0) target = $region13
    $region12: #{tpu_custom_call.1} parent=1 // pred_region
      _
    $region13: #{tpu_custom_call.1} parent=1 // pred_fallthru
      _
    // Predicated region
    $region14: #{tpu_custom_call.1} parent=1 // pred_check
      _
    $region15: #{tpu_custom_call.1} parent=1 // pred_check_branch
      %18 = sbr.rel (0) target = $region17
    $region16: #{tpu_custom_call.1} parent=1 // pred_region
      _
    $region17: #{tpu_custom_call.1} parent=1 // pred_fallthru
      _
    // Predicated region
    $region18: #{tpu_custom_call.1} parent=1 // pred_check
      _
    $region19: #{tpu_custom_call.1} parent=1 // pred_check_branch
      %20 = sbr.rel (0) target = $region21
    $region20: #{tpu_custom_call.1} parent=1 // pred_region
      _
    $region21: #{tpu_custom_call.1} parent=1 // pred_fallthru
      _
    %v22 = vld [vmem:[%s0] sm:$0xff]
    %v23 = vld [vmem:[%s0 + $0x8] sm:$0xff]
    %v24 = vpack.c.bf16 %v23, %v22
    %v25 = vld [vmem:[%s1] sm:$0xf]
    %v26 = vld [vmem:[%s1 + $0x4] sm:$0xf]
    %v27 = vld [vmem:[%s1 + $0x8] sm:$0xf]
    %v28 = vld [vmem:[%s1 + $0xc] sm:$0xf]
    %v29 = vld [vmem:[%s2] sm:$0x1]
    %v31 = vlaneseq
    %v32 = vshrl.u32 %v31, 7
    %v33 = vsub.s32 0, %v32
    %v34 = vrot.slane %v29, %v33
    %v40 = vunpack.c.l.b16 %v25
    %v41 = vunpack.c.l.b16 %v26
    %v42 = vunpack.c.l.b16 %v27
    %v43 = vunpack.c.l.b16 %v28
    %v44 = vpack.c.b16 %v41, %v40
    %v45 = vpack.c.b16 %v43, %v42
    %vm48 = vcmask 261120
    %v50 = vsel %vm48, %v24, 0
    %52 = vmatprep.subr.bf16.mxu0 0
    %53 = vmatpush1.bf16.msra.mxu0 0
    %54 = vmatprep.subr.bf16.mxu0 0
    %55 = vmatpush1.bf16.msra.mxu0 0
    %56 = vmatprep.subr.bf16.mxu0 0
    %57 = vmatpush1.bf16.msra.mxu0 0
    %58 = vmatprep.subr.bf16.mxu0 0
    %59 = vmatpush1.bf16.msra.mxu0 0
    %60 = vmatprep.subr.bf16.mxu0 0
    %61 = vmatpush1.bf16.msra.mxu0 0
    %62 = vmatprep.subr.bf16.mxu0 0
    %63 = vmatpush1.bf16.msra.mxu0 0
    %64 = vmatprep.subr.bf16.mxu0 0
    %65 = vmatpush1.bf16.msra.mxu0 %v45
    %66 = vmatprep.subr.bf16.mxu0 0
    %67 = vmatpush1.bf16.msra.mxu0 %v44
    %68 = vmatprep.subr.bf16.mxu0 0
    %69 = vmatpush2.bf16.msra.mxu0 0
    %70 = vmatprep.subr.bf16.mxu0 0
    %71 = vmatpush2.bf16.msra.mxu0 0
    %72 = vmatprep.subr.bf16.mxu0 0
    %73 = vmatpush2.bf16.msra.mxu0 0
    %74 = vmatprep.subr.bf16.mxu0 0
    %75 = vmatpush2.bf16.msra.mxu0 0
    %76 = vmatprep.subr.bf16.mxu0 0
    %77 = vmatpush2.bf16.msra.mxu0 0
    %78 = vmatprep.subr.bf16.mxu0 0
    %79 = vmatpush2.bf16.msra.mxu0 0
    %80 = vmatprep.subr.bf16.mxu0 0
    %81 = vmatpush2.bf16.msra.mxu0 0
    %82 = vmatprep.subr.bf16.mxu0 0
    %83 = vmatpush2.bf16.msra.mxu0 0
    %84 = vmatprep.mubr.bf16.mxu0 0
    %85 = vmatmul.mubr.bf16.gmra.mxu0 %v50
    %v86 = vpop.f32.mrf.mxu0
    %v87 = vadd.f32 %v34, %v86
    %v88 = vpop.f32.mrf.mxu0
    %v89 = vpop.f32.mrf.mxu0
    %v90 = vadd.f32 %v34, %v89
    %v91 = vpop.f32.mrf.mxu0
    %92 = vdwg.mxu0
    %v93 = vmul.f32 %v87, 0.5
    %v94 = vmul.f32 %v90, 0.5
    %v95 = vmul.f32 %v87, 0.044715
    %v96 = vmul.f32 %v90, 0.044715
    %v97 = vmul.f32 %v95, %v87
    %v98 = vmul.f32 %v96, %v90
    %v99 = vmul.f32 %v97, %v87
    %v100 = vmul.f32 %v98, %v90
    %v101 = vadd.f32 %v87, %v99
    %v102 = vadd.f32 %v90, %v100
    %v103 = vmul.f32 %v101, 0.7978846
    %v104 = vmul.f32 %v102, 0.7978846
    %v105 = vtanh.pop %v103
    %v106 = vtanh.pop %v104
    %v107 = vadd.f32 %v105, 1.0
    %v108 = vadd.f32 %v106, 1.0
    %v109 = vmul.f32 %v93, %v107
    %v110 = vmul.f32 %v94, %v108
    %v111 = vpack.c.bf16 %v110, %v109
    %v112 = vld [vmem:[%s3] sm:$0xf]
    %v113 = vld [vmem:[%s3 + $0x4] sm:$0xf]
    %v114 = vld [vmem:[%s3 + $0x8] sm:$0xf]
    %v115 = vld [vmem:[%s3 + $0xc] sm:$0xf]
    %v116 = vld [vmem:[%s3 + $0x10] sm:$0xf]
    %v117 = vld [vmem:[%s3 + $0x14] sm:$0xf]
    %v118 = vld [vmem:[%s3 + $0x18] sm:$0xf]
    %v119 = vld [vmem:[%s3 + $0x1c] sm:$0xf]
    %v120 = vld [vmem:[%s3 + $0x20] sm:$0xf]
    %v121 = vld [vmem:[%s3 + $0x24] sm:$0xf]
    %v122 = vld [vmem:[%s3 + $0x28] sm:$0xf]
    %v123 = vld [vmem:[%s3 + $0x2c] sm:$0xf]
    %v124 = vld [vmem:[%s3 + $0x30] sm:$0xf]
    %v125 = vld [vmem:[%s3 + $0x34] sm:$0xf]
    %v126 = vld [vmem:[%s3 + $0x38] sm:$0xf]
    %v127 = vld [vmem:[%s3 + $0x3c] sm:$0xf]
    %v128 = vld [vmem:[%s4] sm:$0x1]
    %v130 = vlaneseq
    %v131 = vshrl.u32 %v130, 7
    %v132 = vsub.s32 0, %v131
    %v133 = vrot.slane %v128, %v132
    %v151 = vunpack.c.l.b16 %v112
    %v152 = vunpack.c.l.b16 %v113
    %v153 = vunpack.c.l.b16 %v114
    %v154 = vunpack.c.l.b16 %v115
    %v155 = vunpack.c.l.b16 %v116
    %v156 = vunpack.c.l.b16 %v117
    %v157 = vunpack.c.l.b16 %v118
    %v158 = vunpack.c.l.b16 %v119
    %v159 = vunpack.c.l.b16 %v120
    %v160 = vunpack.c.l.b16 %v121
    %v161 = vunpack.c.l.b16 %v122
    %v162 = vunpack.c.l.b16 %v123
    %v163 = vunpack.c.l.b16 %v124
    %v164 = vunpack.c.l.b16 %v125
    %v165 = vunpack.c.l.b16 %v126
    %v166 = vunpack.c.l.b16 %v127
    %v167 = vpack.c.b16 %v152, %v151
    %v168 = vpack.c.b16 %v154, %v153
    %v169 = vpack.c.b16 %v156, %v155
    %v170 = vpack.c.b16 %v158, %v157
    %v171 = vpack.c.b16 %v160, %v159
    %v172 = vpack.c.b16 %v162, %v161
    %v173 = vpack.c.b16 %v164, %v163
    %v174 = vpack.c.b16 %v166, %v165
    %183 = vmatprep.subr.bf16.mxu0 0
    %184 = vmatpush1.bf16.msra.mxu0 %v174
    %185 = vmatprep.subr.bf16.mxu0 0
    %186 = vmatpush1.bf16.msra.mxu0 %v173
    %187 = vmatprep.subr.bf16.mxu0 0
    %188 = vmatpush1.bf16.msra.mxu0 %v172
    %189 = vmatprep.subr.bf16.mxu0 0
    %190 = vmatpush1.bf16.msra.mxu0 %v171
    %191 = vmatprep.subr.bf16.mxu0 0
    %192 = vmatpush1.bf16.msra.mxu0 %v170
    %193 = vmatprep.subr.bf16.mxu0 0
    %194 = vmatpush1.bf16.msra.mxu0 %v169
    %195 = vmatprep.subr.bf16.mxu0 0
    %196 = vmatpush1.bf16.msra.mxu0 %v168
    %197 = vmatprep.subr.bf16.mxu0 0
    %198 = vmatpush1.bf16.msra.mxu0 %v167
    %199 = vmatprep.subr.bf16.mxu0 0
    %200 = vmatpush2.bf16.msra.mxu0 0
    %201 = vmatprep.subr.bf16.mxu0 0
    %202 = vmatpush2.bf16.msra.mxu0 0
    %203 = vmatprep.subr.bf16.mxu0 0
    %204 = vmatpush2.bf16.msra.mxu0 0
    %205 = vmatprep.subr.bf16.mxu0 0
    %206 = vmatpush2.bf16.msra.mxu0 0
    %207 = vmatprep.subr.bf16.mxu0 0
    %208 = vmatpush2.bf16.msra.mxu0 0
    %209 = vmatprep.subr.bf16.mxu0 0
    %210 = vmatpush2.bf16.msra.mxu0 0
    %211 = vmatprep.subr.bf16.mxu0 0
    %212 = vmatpush2.bf16.msra.mxu0 0
    %213 = vmatprep.subr.bf16.mxu0 0
    %214 = vmatpush2.bf16.msra.mxu0 0
    %215 = vmatprep.mubr.bf16.mxu0 0
    %216 = vmatmul.mubr.bf16.gmra.mxu0 %v111
    %v217 = vpop.f32.mrf.mxu0
    %v218 = vadd.f32 %v133, %v217
    %v219 = vpop.f32.mrf.mxu0
    %v220 = vpop.f32.mrf.mxu0
    %v221 = vadd.f32 %v133, %v220
    %v222 = vpop.f32.mrf.mxu0
    %223 = vdwg.mxu0
    %224 = vst.msk [vmem:[#allocation2] sm:$0xff] %vm48, %v218
    %225 = vst.msk [vmem:[#allocation2 + $0x8] sm:$0xff] %vm48, %v221
    // Predicated region
    $region22: #{tpu_custom_call.1} parent=1 // pred_check
      _
    $region23: #{tpu_custom_call.1} parent=1 // pred_check_branch
      %227 = sbr.rel (0) target = $region25
    $region24: #{tpu_custom_call.1} parent=1 // pred_region
      %s229 = ssub.s32 256, 256
      %230 = vsyncadd [#allocation3], %s229
      %s231 = sshll.u32 [#allocation2], 4
      %s232 = int_to_ptr.vmem [resolvable:$true] %s231
      %237 = dma.vmem_to_hbm [thread:$0]  %s232, 256, %s5, [#allocation3], 128, 128, 8
    $region25: #{tpu_custom_call.1} parent=1 // pred_fallthru
      _
    // Predicated region
    $region26: #{tpu_custom_call.1} parent=1 // pred_check
      _
    $region27: #{tpu_custom_call.1} parent=1 // pred_check_branch
      %239 = sbr.rel (0) target = $region29
    $region28: #{tpu_custom_call.1} parent=1 // pred_region
      %240 = dma.done [#allocation3], 256
    $region29: #{tpu_custom_call.1} parent=1 // pred_fallthru
      _
    %241 = vsyncpa [#allocation3], 1

</llo_original>
